<compile_context>
chip_gen: v7x
topology: tpu7x:2x2x1
jax: 0.10.0
libtpu: 0.0.40
codegen_flags: <defaults>
</compile_context>

<pallas_src>
import functools

import numpy as np
import jax
import jax.numpy as jnp
from jax import lax
from jax.experimental import pallas as pl
from jax.experimental.pallas import tpu as pltpu

LANE = 128
BLOCK_ROWS_MAX = 4096   # 4096 x 128 f32 = 2 MiB per input block (x2 inputs, x2 buffers)
SUB_ROWS = 512          # compute sub-chunk: bounds elementwise temporaries to ~0.25 MiB


def _accumulate(pred_ref, tgt_ref, out_ref, *, n_sub, sub_rows, fold_rows,
                valid_rows):
    """Accumulate [S_all, S_pos, N_pos] partials for this grid step into out_ref."""

    def fold(v):
        # (sub_rows, 128) -> (fold_rows, 128) vreg-wise partial sum (pure VPU adds).
        if fold_rows == 8:
            return jnp.sum(v.reshape(-1, 8, LANE), axis=0)
        return jnp.sum(v, axis=0, keepdims=True)

    def chunk(x, t, r0):
        x = x.astype(jnp.float32)
        t = t.astype(jnp.float32)
        pos = t > 0.5
        # Numerically-stable BCE-with-logits (matches torch.BCEWithLogitsLoss):
        #   max(x, 0) - x*t + log(1 + exp(-|x|))   (raw target in the x*t term)
        bce = (jnp.maximum(x, 0.0) - x * t
               + jnp.log1p(jnp.exp(-jnp.abs(x))))
        if valid_rows is not None:
            # Only the ragged tail tile pays for the iota + mask.
            rid = lax.broadcasted_iota(jnp.int32, x.shape, 0)
            valid = (rid + r0) < valid_rows
            bce = jnp.where(valid, bce, jnp.float32(0.0))
            pos = jnp.logical_and(pos, valid)
        pos_f = pos.astype(jnp.float32)
        return fold(bce), fold(bce * pos_f), fold(pos_f)

    if n_sub == 1:
        a, p, c = chunk(pred_ref[pl.ds(0, sub_rows), :],
                        tgt_ref[pl.ds(0, sub_rows), :], 0)
    else:
        def body(i, carry):
            r0 = pl.multiple_of(i * sub_rows, sub_rows)
            a, p, c = chunk(pred_ref[pl.ds(r0, sub_rows), :],
                            tgt_ref[pl.ds(r0, sub_rows), :], r0)
            return (carry[0] + a, carry[1] + p, carry[2] + c)

        zero = jnp.zeros((fold_rows, LANE), jnp.float32)
        a, p, c = lax.fori_loop(0, n_sub, body, (zero, zero, zero))

    out_ref[0] += a
    out_ref[1] += p
    out_ref[2] += c


def _wbce_partial_kernel(pred_ref, tgt_ref, out_ref, *, sub_rows, fold_rows,
                         n_sub_main, n_sub_tail, tail_rows):
    step = pl.program_id(0)

    @pl.when(step == 0)
    def _():
        out_ref[...] = jnp.zeros_like(out_ref)

    if tail_rows == 0:
        # No ragged tail: every tile takes the mask-free fast path.
        _accumulate(pred_ref, tgt_ref, out_ref, n_sub=n_sub_main,
                    sub_rows=sub_rows, fold_rows=fold_rows, valid_rows=None)
    else:
        last = pl.num_programs(0) - 1

        @pl.when(step < last)
        def _():
            _accumulate(pred_ref, tgt_ref, out_ref, n_sub=n_sub_main,
                        sub_rows=sub_rows, fold_rows=fold_rows,
                        valid_rows=None)

        @pl.when(step == last)
        def _():
            _accumulate(pred_ref, tgt_ref, out_ref, n_sub=n_sub_tail,
                        sub_rows=sub_rows, fold_rows=fold_rows,
                        valid_rows=tail_rows)


def loss_bce(pred, target, size_average=True, batch_average=True):
    """Forward pass of Loss_BCE. pred/target: (N, C, H, W); pred = logits."""
    n, c, h, w = pred.shape
    total = n * c * h * w

    pred_flat = pred.reshape(-1)
    tgt_flat = target.reshape(-1)
    if not jnp.issubdtype(pred_flat.dtype, jnp.floating):
        pred_flat = pred_flat.astype(jnp.float32)
    if not jnp.issubdtype(tgt_flat.dtype, jnp.floating):
        tgt_flat = tgt_flat.astype(jnp.float32)

    # Lane alignment only (<=127 elements). The zero pads (pred=0, t=0) each
    # contribute exactly log(2) to S_all and nothing to S_pos / N_pos, which
    # is corrected analytically below — no full-array mask or big pad pass.
    pad = (-total) % LANE
    pad_correction = 0.0
    if pad:
        pred_flat = jnp.pad(pred_flat, (0, pad))
        tgt_flat = jnp.pad(tgt_flat, (0, pad))
        pad_correction = pad * float(np.log(2.0))

    rows = (total + pad) // LANE

    if rows > SUB_ROWS:
        block_rows = min(BLOCK_ROWS_MAX, (rows // SUB_ROWS) * SUB_ROWS)
        sub_rows = SUB_ROWS
    else:
        block_rows = rows        # full-extent block (always legal)
        sub_rows = rows
    grid_rows = -(-rows // block_rows)
    tail_rows = rows % block_rows                    # 0 => no ragged tail tile
    n_sub_main = block_rows // sub_rows
    n_sub_tail = -(-tail_rows // sub_rows) if tail_rows else 0
    fold_rows = 8 if sub_rows % 8 == 0 else 1

    pred2d = pred_flat.reshape(rows, LANE)
    tgt2d = tgt_flat.reshape(rows, LANE)

    kernel = functools.partial(
        _wbce_partial_kernel, sub_rows=sub_rows, fold_rows=fold_rows,
        n_sub_main=n_sub_main, n_sub_tail=n_sub_tail, tail_rows=tail_rows)

    bytes_in = (pred2d.size * pred2d.dtype.itemsize
                + tgt2d.size * tgt2d.dtype.itemsize)

    parts = pl.pallas_call(
        kernel,
        out_shape=jax.ShapeDtypeStruct((3, fold_rows, LANE), jnp.float32),
        grid_spec=pltpu.PrefetchScalarGridSpec(
            num_scalar_prefetch=0,
            grid=(grid_rows,),
            in_specs=[pl.BlockSpec((block_rows, LANE), lambda i: (i, 0)),
                      pl.BlockSpec((block_rows, LANE), lambda i: (i, 0))],
            out_specs=pl.BlockSpec((3, fold_rows, LANE), lambda i: (0, 0, 0)),
        ),
        compiler_params=pltpu.CompilerParams(
            dimension_semantics=("arbitrary",)),
        cost_estimate=pl.CostEstimate(
            flops=12 * total,
            transcendentals=2 * total,
            bytes_accessed=bytes_in + 3 * fold_rows * LANE * 4),
    )(pred2d, tgt2d)

    # Tiny final reduction in plain JAX: (3, fold_rows, 128) -> 3 scalars.
    sums = jnp.sum(parts, axis=(1, 2))
    s_all = sums[0] - jnp.float32(pad_correction)
    s_pos = sums[1]
    n_pos = sums[2]

    pos_num = n_pos
    neg_num = jnp.float32(total) - n_pos
    pos_loss = s_pos
    neg_loss = s_all - s_pos
    sum_num = jnp.float32(total)   # pos_num + neg_num (every element is one or the other)

    # weight[pos] = neg_num/sum_num, weight[neg] = pos_num/sum_num, reduction='sum'
    loss = (neg_num * pos_loss + pos_num * neg_loss) / sum_num
    if size_average:
        loss = loss / (h * w)
    if batch_average:
        loss = loss / n
    return loss


def _loss_bce_ref(pred, target, size_average=True, batch_average=True):
    """Plain-JAX reference (mirrors the PyTorch WeightedBCE2d)."""
    n, c, h, w = pred.shape
    pred = pred.astype(jnp.float32)
    target = target.astype(jnp.float32)
    pos = (target > 0.5).astype(jnp.float32)
    neg = 1.0 - pos
    pos_num = jnp.sum(pos)
    neg_num = jnp.sum(neg)
    sum_num = pos_num + neg_num
    weight = pos * (neg_num / sum_num) + neg * (pos_num / sum_num)
    bce = jnp.maximum(pred, 0.0) - pred * target + jnp.log1p(jnp.exp(-jnp.abs(pred)))
    loss = jnp.sum(weight * bce)
    if size_average:
        loss = loss / (h * w)
    if batch_average:
        loss = loss / n
    return loss


if __name__ == "__main__":
    key = jax.random.PRNGKey(0)

    # 1) Small binary-segmentation-style inputs: N=2, C=1, H=W=16 (single tile).
    k1, k2, k3, k4, k5, k6 = jax.random.split(key, 6)
    pred = jax.random.normal(k1, (2, 1, 16, 16), dtype=jnp.float32) * 2.0
    target = (jax.random.uniform(k2, (2, 1, 16, 16)) > 0.7).astype(jnp.float32)
    out = jax.block_until_ready(loss_bce(pred, target))
    ref = _loss_bce_ref(pred, target)
    np.testing.assert_allclose(np.asarray(out), np.asarray(ref),
                               rtol=1e-4, atol=1e-6)

    # 2) Larger input exercising the multi-step grid + ragged tail tile path.
    pred2 = jax.random.normal(k3, (2, 1, 520, 520), dtype=jnp.float32) * 2.0
    target2 = (jax.random.uniform(k4, (2, 1, 520, 520)) > 0.7).astype(jnp.float32)
    out2 = jax.block_until_ready(loss_bce(pred2, target2))
    ref2 = _loss_bce_ref(pred2, target2)
    np.testing.assert_allclose(np.asarray(out2), np.asarray(ref2),
                               rtol=1e-4, atol=1e-6)

    # 3) Lane-unaligned total exercising the small pad + log(2) correction.
    pred3 = jax.random.normal(k5, (2, 1, 15, 15), dtype=jnp.float32) * 2.0
    target3 = (jax.random.uniform(k6, (2, 1, 15, 15)) > 0.7).astype(jnp.float32)
    out3 = jax.block_until_ready(loss_bce(pred3, target3))
    ref3 = _loss_bce_ref(pred3, target3)
    np.testing.assert_allclose(np.asarray(out3), np.asarray(ref3),
                               rtol=1e-4, atol=1e-6)

    print("KERNEL_OK")
</pallas_src>

<mosaic_0001>
module attributes {stable_mosaic.version = 11 : i64} {
  func.func @_wbce_partial_kernel(%arg0: i32, %arg1: memref<4x128xf32, #tpu.memory_space<vmem>>, %arg2: memref<4x128xf32, #tpu.memory_space<vmem>>, %arg3: memref<3x1x128xf32, #tpu.memory_space<vmem>>) attributes {dimension_semantics = [#tpu.dimension_semantics<arbitrary>], iteration_bounds = array<i64: 1>, scalar_prefetch = 0 : i64, scratch_operands = 0 : i64, tpu.core_type = #tpu.core_type<tc>, window_params = [{transform_indices = @transform_0, window_bounds = array<i64: 4, 128>}, {transform_indices = @transform_1, window_bounds = array<i64: 4, 128>}, {pipeline_mode = #tpu.pipeline_mode<synchronous>, transform_indices = @transform_2, window_bounds = array<i64: 3, 1, 128>}]} {
    %c0_i32 = arith.constant 0 : i32
    %0 = arith.cmpi eq, %arg0, %c0_i32 : i32
    %1 = arith.extui %0 : i1 to i32
    %c0_i32_0 = arith.constant 0 : i32
    %2 = arith.cmpi ne, %1, %c0_i32_0 : i32
    scf.if %2 {
      %cst_25 = arith.constant 0.000000e+00 : f32
      %44 = vector.broadcast %cst_25 : f32 to vector<3x1x128xf32>
      %c0_26 = arith.constant 0 : index
      %c0_27 = arith.constant 0 : index
      %c0_28 = arith.constant 0 : index
      %45 = vector.load %arg3[%c0_26, %c0_27, %c0_28] : memref<3x1x128xf32, #tpu.memory_space<vmem>>, vector<3x1x128xf32>
      tpu.vector_store %arg3[%c0_26, %c0_27, %c0_28], %44 {strides = array<i32>} : memref<3x1x128xf32, #tpu.memory_space<vmem>>, vector<3x1x128xf32>,
    } else {
    }
    %c0 = arith.constant 0 : index
    %c0_1 = arith.constant 0 : index
    %3 = vector.load %arg1[%c0, %c0_1] : memref<4x128xf32, #tpu.memory_space<vmem>>, vector<4x128xf32>
    %c0_2 = arith.constant 0 : index
    %c0_3 = arith.constant 0 : index
    %4 = vector.load %arg2[%c0_2, %c0_3] : memref<4x128xf32, #tpu.memory_space<vmem>>, vector<4x128xf32>
    %cst = arith.constant 5.000000e-01 : f32
    %5 = vector.broadcast %cst : f32 to vector<4x128xf32>
    %6 = arith.cmpf ogt, %4, %5 : vector<4x128xf32>
    %cst_4 = arith.constant 0.000000e+00 : f32
    %7 = vector.broadcast %cst_4 : f32 to vector<4x128xf32>
    %8 = arith.maximumf %3, %7 : vector<4x128xf32>
    %9 = arith.mulf %3, %4 : vector<4x128xf32>
    %10 = arith.subf %8, %9 : vector<4x128xf32>
    %11 = math.absf %3 : vector<4x128xf32>
    %cst_5 = arith.constant 0.000000e+00 : f32
    %12 = vector.broadcast %cst_5 : f32 to vector<4x128xf32>
    %13 = arith.subf %12, %11 : vector<4x128xf32>
    %14 = math.exp %13 : vector<4x128xf32>
    %15 = math.log1p %14 : vector<4x128xf32>
    %16 = arith.addf %10, %15 : vector<4x128xf32>
    %17 = arith.extui %6 : vector<4x128xi1> to vector<4x128xi32>
    %18 = arith.sitofp %17 : vector<4x128xi32> to vector<4x128xf32>
    %cst_6 = arith.constant dense<0.000000e+00> : vector<128xf32>
    %19 = vector.multi_reduction <add>, %16, %cst_6 [0] : vector<4x128xf32> to vector<128xf32>
    %20 = vector.shape_cast %19 : vector<128xf32> to vector<1x128xf32>
    %21 = arith.mulf %16, %18 : vector<4x128xf32>
    %cst_7 = arith.constant dense<0.000000e+00> : vector<128xf32>
    %22 = vector.multi_reduction <add>, %21, %cst_7 [0] : vector<4x128xf32> to vector<128xf32>
    %23 = vector.shape_cast %22 : vector<128xf32> to vector<1x128xf32>
    %cst_8 = arith.constant dense<0.000000e+00> : vector<128xf32>
    %24 = vector.multi_reduction <add>, %18, %cst_8 [0] : vector<4x128xf32> to vector<128xf32>
    %25 = vector.shape_cast %24 : vector<128xf32> to vector<1x128xf32>
    %c0_9 = arith.constant 0 : index
    %c0_10 = arith.constant 0 : index
    %c0_11 = arith.constant 0 : index
    %26 = vector.load %arg3[%c0_9, %c0_10, %c0_11] : memref<3x1x128xf32, #tpu.memory_space<vmem>>, vector<1x1x128xf32>
    %27 = vector.shape_cast %26 : vector<1x1x128xf32> to vector<1x128xf32>
    %28 = arith.addf %27, %20 : vector<1x128xf32>
    %c0_12 = arith.constant 0 : index
    %c0_13 = arith.constant 0 : index
    %c0_14 = arith.constant 0 : index
    %29 = vector.load %arg3[%c0_12, %c0_13, %c0_14] : memref<3x1x128xf32, #tpu.memory_space<vmem>>, vector<1x1x128xf32>
    %30 = vector.shape_cast %29 : vector<1x1x128xf32> to vector<1x128xf32>
    %31 = vector.shape_cast %28 : vector<1x128xf32> to vector<1x1x128xf32>
    tpu.vector_store %arg3[%c0_12, %c0_13, %c0_14], %31 {strides = array<i32>} : memref<3x1x128xf32, #tpu.memory_space<vmem>>, vector<1x1x128xf32>,
    %c1 = arith.constant 1 : index
    %c0_15 = arith.constant 0 : index
    %c0_16 = arith.constant 0 : index
    %32 = vector.load %arg3[%c1, %c0_15, %c0_16] : memref<3x1x128xf32, #tpu.memory_space<vmem>>, vector<1x1x128xf32>
    %33 = vector.shape_cast %32 : vector<1x1x128xf32> to vector<1x128xf32>
    %34 = arith.addf %33, %23 : vector<1x128xf32>
    %c1_17 = arith.constant 1 : index
    %c0_18 = arith.constant 0 : index
    %c0_19 = arith.constant 0 : index
    %35 = vector.load %arg3[%c1_17, %c0_18, %c0_19] : memref<3x1x128xf32, #tpu.memory_space<vmem>>, vector<1x1x128xf32>
    %36 = vector.shape_cast %35 : vector<1x1x128xf32> to vector<1x128xf32>
    %37 = vector.shape_cast %34 : vector<1x128xf32> to vector<1x1x128xf32>
    tpu.vector_store %arg3[%c1_17, %c0_18, %c0_19], %37 {strides = array<i32>} : memref<3x1x128xf32, #tpu.memory_space<vmem>>, vector<1x1x128xf32>,
    %c2 = arith.constant 2 : index
    %c0_20 = arith.constant 0 : index
    %c0_21 = arith.constant 0 : index
    %38 = vector.load %arg3[%c2, %c0_20, %c0_21] : memref<3x1x128xf32, #tpu.memory_space<vmem>>, vector<1x1x128xf32>
    %39 = vector.shape_cast %38 : vector<1x1x128xf32> to vector<1x128xf32>
    %40 = arith.addf %39, %25 : vector<1x128xf32>
    %c2_22 = arith.constant 2 : index
    %c0_23 = arith.constant 0 : index
    %c0_24 = arith.constant 0 : index
    %41 = vector.load %arg3[%c2_22, %c0_23, %c0_24] : memref<3x1x128xf32, #tpu.memory_space<vmem>>, vector<1x1x128xf32>
    %42 = vector.shape_cast %41 : vector<1x1x128xf32> to vector<1x128xf32>
    %43 = vector.shape_cast %40 : vector<1x128xf32> to vector<1x1x128xf32>
    tpu.vector_store %arg3[%c2_22, %c0_23, %c0_24], %43 {strides = array<i32>} : memref<3x1x128xf32, #tpu.memory_space<vmem>>, vector<1x1x128xf32>,
    return
  }
  func.func @transform_0(%arg0: i32) -> (i32, i32) {
    %c0_i32 = arith.constant 0 : i32
    %c0_i32_0 = arith.constant 0 : i32
    return %arg0, %c0_i32 : i32, i32
  }
  func.func @transform_1(%arg0: i32) -> (i32, i32) {
    %c0_i32 = arith.constant 0 : i32
    %c0_i32_0 = arith.constant 0 : i32
    return %arg0, %c0_i32 : i32, i32
  }
  func.func @transform_2(%arg0: i32) -> (i32, i32, i32) {
    %c0_i32 = arith.constant 0 : i32
    %c0_i32_0 = arith.constant 0 : i32
    %c0_i32_1 = arith.constant 0 : i32
    %c0_i32_2 = arith.constant 0 : i32
    return %c0_i32, %c0_i32_0, %c0_i32_1 : i32, i32, i32
  }
}

</mosaic_0001>

<llo_original>
// kernel: tpu_custom_call.1
$region0: #{tpu_custom_call.1}
  #allocation0 [shape = 'u32[]', space=smem, size = 0x4, offset = 0x4, fixed_abs, tag = 'smem constant byte address 0x4 - core index']
  #allocation1 [shape = 'u32[144,128]{1,0:T(1,128)}', space=vmem, size = 0x12000, scoped, tag = 'internal scratch']
  %s0 = inlined_call_operand.hbm [shape: f32[4,128], index: 0, kind: input, shape index: {}]
  %s1 = inlined_call_operand.hbm [shape: f32[4,128], index: 1, kind: input, shape index: {}]
  %s2 = inlined_call_operand.hbm [shape: f32[3,1,128], index: 2, kind: output, shape index: {}]
  %s3 = sld [smem:[#allocation0]]
  $region30: #{tpu_custom_call.1} parent=0
    _
  %s5 = ssub.s32 1, %s3
  %s6 = scalar_select 0, %s5, %s3
  $region1: #{tpu_custom_call.1} parent=0
    #allocation2 [shape = 'u8[2048]{0}', space=vmem, size = 0x800, scoped, tag = 'input window, operand 0, single buffered']
    #allocation3 [shape = 's32[1]{0}', space=sflag, size = 0x4, scoped, tag = 'scoped memory for tpu_custom_call.1']
    #allocation4 [shape = 's32[1]{0}', space=sflag, size = 0x4, scoped, tag = 'scoped memory for tpu_custom_call.1']
    #allocation5 [shape = 'u8[2048]{0}', space=vmem, size = 0x800, scoped, tag = 'input window, operand 1, single buffered']
    #allocation6 [shape = 's32[1]{0}', space=sflag, size = 0x4, scoped, tag = 'scoped memory for tpu_custom_call.1']
    #allocation7 [shape = 'u8[1536]{0}', space=vmem, size = 0x800, scoped, tag = 'output window, operand 0, single buffered']
    %7 = vsyncpa [#allocation3], 0
    %8 = vsyncpa [#allocation6], 0
    %9 = vsyncpa [#allocation4], 0
    // Predicated region
    $region2: #{tpu_custom_call.1} parent=1 // pred_check
      _
    $region3: #{tpu_custom_call.1} parent=1 // pred_check_branch
      %11 = sbr.rel (0) target = $region5
    $region4: #{tpu_custom_call.1} parent=1 // pred_region
      %s13 = ssub.s32 64, 64
      %14 = vsyncadd [#allocation3], %s13
      %s16 = sshll.u32 [#allocation2], 4
      %s17 = int_to_ptr.vmem [resolvable:$true] %s16
      %19 = dma.hbm_to_vmem [thread:$0]  %s0, 64, %s17, [#allocation3]
    $region5: #{tpu_custom_call.1} parent=1 // pred_fallthru
      _
    // Predicated region
    $region6: #{tpu_custom_call.1} parent=1 // pred_check
      _
    $region7: #{tpu_custom_call.1} parent=1 // pred_check_branch
      %21 = sbr.rel (0) target = $region9
    $region8: #{tpu_custom_call.1} parent=1 // pred_region
      %s23 = ssub.s32 64, 64
      %24 = vsyncadd [#allocation6], %s23
      %s26 = sshll.u32 [#allocation5], 4
      %s27 = int_to_ptr.vmem [resolvable:$true] %s26
      %29 = dma.hbm_to_vmem [thread:$0]  %s1, 64, %s27, [#allocation6]
    $region9: #{tpu_custom_call.1} parent=1 // pred_fallthru
      _
    // Predicated region
    $region10: #{tpu_custom_call.1} parent=1 // pred_check
      _
    $region11: #{tpu_custom_call.1} parent=1 // pred_check_branch
      %31 = sbr.rel (0) target = $region13
    $region12: #{tpu_custom_call.1} parent=1 // pred_region
      %32 = dma.done [#allocation3], 64
    $region13: #{tpu_custom_call.1} parent=1 // pred_fallthru
      _
    // Predicated region
    $region14: #{tpu_custom_call.1} parent=1 // pred_check
      _
    $region15: #{tpu_custom_call.1} parent=1 // pred_check_branch
      %34 = sbr.rel (0) target = $region17
    $region16: #{tpu_custom_call.1} parent=1 // pred_region
      %35 = dma.done [#allocation6], 64
    $region17: #{tpu_custom_call.1} parent=1 // pred_fallthru
      _
    %p36 = scmp.eq.s32.totalorder 0, 0
    // Predicated region
    $region18: #{tpu_custom_call.1} parent=1 // pred_check
      %p37 = pneg %p36
    $region19: #{tpu_custom_call.1} parent=1 // pred_check_branch
      %39 = sbr.rel (%p37) target = $region21
    $region20: #{tpu_custom_call.1} parent=1 // pred_region
      %40 = vst [vmem:[#allocation7] sm:$0x1] 0.0
      %41 = vst [vmem:[#allocation7 + $0x1] sm:$0x1] 0.0
      %42 = vst [vmem:[#allocation7 + $0x2] sm:$0x1] 0.0
    $region21: #{tpu_custom_call.1} parent=1 // pred_fallthru
      _
    %v43 = vld [vmem:[#allocation2] sm:$0xf]
    %v44 = vld [vmem:[#allocation5] sm:$0xf]
    %vm45 = vcmp.gt.f32.partialorder %v44, 0.5
    %v46 = vmax.f32 %v43, 0.0
    %v47 = vmul.f32 %v43, %v44
    %v48 = vsub.f32 %v46, %v47
    %v49 = vand.u32 2147483647, %v43
    %v50 = vsub.f32 0.0, %v49
    %v51 = vmul.f32 %v50, 1.442695
    %v52 = vpow.pop %v51
    %v53 = vadd.f32 %v52, 1.0
    %v54 = vlog2.pop %v53
    %v55 = vmul.f32 %v54, 0.6931472
    %v56 = vmul.f32 -0.5, %v52
    %v57 = vadd.f32 %v56, 1.0
    %v58 = vmul.f32 %v57, %v52
    %v59 = vand.u32 2147483647, %v52
    %vm60 = vcmp.lt.f32.partialorder %v59, 0.0004427343
    %v61 = vsel %vm60, %v58, %v55
    %v62 = vadd.f32 %v48, %v61
    %v63 = vsel %vm45, 1, 0
    %v64 = vcvt.s32.f32 %v63
    %vm65 = vcmask 1043456
    %v66 = vsel %vm65, %v62, 0.0
    %v67 = vrot.slane %v66, 4
    %v68 = vadd.f32 %v66, %v67
    %v69 = vrot.slane %v68, 2
    %v70 = vadd.f32 %v68, %v69
    %v71 = vrot.slane %v70, 1
    %v72 = vadd.f32 %v70, %v71
    %v73 = vmul.f32 %v62, %v64
    %v74 = vsel %vm65, %v73, 0.0
    %v75 = vrot.slane %v74, 4
    %v76 = vadd.f32 %v74, %v75
    %v77 = vrot.slane %v76, 2
    %v78 = vadd.f32 %v76, %v77
    %v79 = vrot.slane %v78, 1
    %v80 = vadd.f32 %v78, %v79
    %v81 = vsel %vm65, %v64, 0.0
    %v82 = vrot.slane %v81, 4
    %v83 = vadd.f32 %v81, %v82
    %v84 = vrot.slane %v83, 2
    %v85 = vadd.f32 %v83, %v84
    %v86 = vrot.slane %v85, 1
    %v87 = vadd.f32 %v85, %v86
    %v88 = vld [vmem:[#allocation7] sm:$0x1]
    %v89 = vadd.f32 %v88, %v72
    %90 = vst [vmem:[#allocation7] sm:$0x1] %v89
    %s91 = scalar_lea.vmem [#allocation7], 1
    %v92 = vld [vmem:[%s91] sm:$0x1]
    %v93 = vadd.f32 %v92, %v80
    %94 = vst [vmem:[%s91] sm:$0x1] %v93
    %s95 = scalar_lea.vmem [#allocation7], 2
    %v96 = vld [vmem:[%s95] sm:$0x1]
    %v97 = vadd.f32 %v96, %v87
    %98 = vst [vmem:[%s95] sm:$0x1] %v97
    // Predicated region
    $region22: #{tpu_custom_call.1} parent=1 // pred_check
      _
    $region23: #{tpu_custom_call.1} parent=1 // pred_check_branch
      %100 = sbr.rel (0) target = $region25
    $region24: #{tpu_custom_call.1} parent=1 // pred_region
      %s102 = ssub.s32 48, 48
      %103 = vsyncadd [#allocation4], %s102
      %s104 = sshll.u32 [#allocation7], 4
      %s105 = int_to_ptr.vmem [resolvable:$true] %s104
      %110 = dma.vmem_to_hbm [thread:$0]  %s105, 48, %s2, [#allocation4], 16, 16, 1
    $region25: #{tpu_custom_call.1} parent=1 // pred_fallthru
      _
    // Predicated region
    $region26: #{tpu_custom_call.1} parent=1 // pred_check
      _
    $region27: #{tpu_custom_call.1} parent=1 // pred_check_branch
      %112 = sbr.rel (0) target = $region29
    $region28: #{tpu_custom_call.1} parent=1 // pred_region
      %113 = dma.done [#allocation4], 48
    $region29: #{tpu_custom_call.1} parent=1 // pred_fallthru
      _
    %114 = vsyncpa [#allocation3], 1
    %115 = vsyncpa [#allocation6], 1
    %116 = vsyncpa [#allocation4], 1

</llo_original>
